<compile_context>
chip_gen: v7x
topology: tpu7x:2x2x1
jax: 0.10.0
libtpu: 0.0.40
codegen_flags: <defaults>
</compile_context>

<pallas_src>
import math

import numpy as np
import jax
import jax.numpy as jnp
from jax.experimental import pallas as pl
from jax.experimental.pallas import tpu as pltpu


N_OUT = 3          # real number of Q-values (fc2 output width)
N_PAD = 128        # lane-dense padded output width


# ----------------------------- Pallas kernel -------------------------------

def _dqn_fused_kernel(x_ref, w1_ref, b1_ref, w2_ref, b2_ref,
                      w3_ref, b3_ref, w4_ref, b4_ref, o_ref):
    # conv1 folded into a (147, 144) matmul; bf16 operands, f32 MXU accumulate.
    h = jnp.dot(x_ref[...], w1_ref[...], preferred_element_type=jnp.float32)
    h = jnp.maximum(h + b1_ref[...], 0.0)                     # (bm, 144) NHWC-flat
    # conv2 (k=2, s=1) folded into a (144, 64) map on the NHWC-flat activation.
    h = jnp.dot(h.astype(w2_ref.dtype), w2_ref[...],
                preferred_element_type=jnp.float32)
    h = jnp.maximum(h + b2_ref[...], 0.0)                     # (bm, 64) NHWC-flat
    # fc1 (+ReLU); w3 rows pre-permuted from NCHW flatten to NHWC-flat order.
    h = jnp.dot(h.astype(w3_ref.dtype), w3_ref[...],
                preferred_element_type=jnp.float32)
    h = jnp.maximum(h + b3_ref[...], 0.0)                     # (bm, 64)
    # fc2, zero-padded 3 -> 128 columns so the store is a full-width vst.
    h = jnp.dot(h.astype(w4_ref.dtype), w4_ref[...],
                preferred_element_type=jnp.float32)
    o_ref[...] = (h + b4_ref[...]).astype(o_ref.dtype)        # (bm, 128)


# ------------------------------ Pallas wrapper ------------------------------

def _round_up(v, m):
    return ((v + m - 1) // m) * m


def _pick_bm(B, block_m):
    """M tile: multiple of 8 whenever it tiles B; >=2 grid steps at moderate
    batch so v7x's two TensorCores both get work; never below 64 rows/tile."""
    block_m = max(8, (int(block_m) // 8) * 8)
    if B > block_m:
        return block_m
    if B >= 128:
        return min(block_m, max(64, _round_up(pl.cdiv(B, 2), 8)))
    return B                       # single tile == full batch dim (always legal)


def _resident_spec(arr):
    """Full-array block with a constant index_map: DMA'd once, stays in VMEM."""
    ndim = arr.ndim
    return pl.BlockSpec(arr.shape, lambda m: (0,) * ndim)


def dqn_conv_forward(x, pp, *, block_m=1024, n_out=N_OUT):
    """x: (B, 3, 7, 7) NCHW float32; pp: prepared (matmul-form, bf16) params."""
    B = x.shape[0]
    k_in = x.shape[1] * x.shape[2] * x.shape[3]          # 147
    n_pad = pp["w4"].shape[1]                            # 128 (lane-dense)
    x_flat = x.reshape(B, k_in).astype(pp["w1"].dtype)   # free NCHW flatten + bf16

    bm = _pick_bm(B, block_m)
    grid = (pl.cdiv(B, bm),)

    flops = 2 * B * sum(pp[k].shape[0] * pp[k].shape[1]
                        for k in ("w1", "w2", "w3", "w4"))
    param_bytes = sum(int(np.prod(pp[k].shape)) * pp[k].dtype.itemsize for k in pp)
    bytes_accessed = (x_flat.size * x_flat.dtype.itemsize   # bf16 input read
                      + B * n_pad * 4                       # f32 padded output write
                      + param_bytes)                        # resident weights/biases

    out = pl.pallas_call(
        _dqn_fused_kernel,
        out_shape=jax.ShapeDtypeStruct((B, n_pad), jnp.float32),
        grid=grid,
        in_specs=[
            pl.BlockSpec((bm, k_in), lambda m: (m, 0)),
            _resident_spec(pp["w1"]), _resident_spec(pp["b1"]),
            _resident_spec(pp["w2"]), _resident_spec(pp["b2"]),
            _resident_spec(pp["w3"]), _resident_spec(pp["b3"]),
            _resident_spec(pp["w4"]), _resident_spec(pp["b4"]),
        ],
        out_specs=pl.BlockSpec((bm, n_pad), lambda m: (m, 0)),
        compiler_params=pltpu.CompilerParams(
            dimension_semantics=("parallel",)),
        cost_estimate=pl.CostEstimate(
            flops=flops, transcendentals=0, bytes_accessed=bytes_accessed),
    )(x_flat, pp["w1"], pp["b1"], pp["w2"], pp["b2"],
      pp["w3"], pp["b3"], pp["w4"], pp["b4"])

    return out[:, :n_out]                        # drop lane padding outside the kernel


# ------------------- one-time parameter preparation (host) ------------------

def prepare_params(p, *, compute_dtype=jnp.bfloat16):
    """Fold im2col of both convs and the NCHW->NHWC flatten permutation into
    dense matmul weights, zero-pad fc2 to a 128-wide lane-dense output, and
    cast the matmul weights to bf16 (biases stay f32).  One-time, at init."""
    C0, Hin, Win = 3, 7, 7
    C1, K1, S1 = 16, 3, 2
    C2, K2 = 16, 2
    H1 = (Hin - K1) // S1 + 1                          # 3
    W1 = (Win - K1) // S1 + 1                          # 3
    H2, W2 = H1 - K2 + 1, W1 - K2 + 1                  # 2, 2

    w_c1 = np.asarray(p["w_conv1"], np.float32)        # (C1, C0, K1, K1)
    w_c2 = np.asarray(p["w_conv2"], np.float32)        # (C2, C1, K2, K2)

    # conv1: (C0*Hin*Win, H1*W1*C1) matrix on the NCHW-flat input; output is the
    # conv1 activation in NHWC-flat ((i, j) major, channel minor) order.
    W1_big = np.zeros((C0 * Hin * Win, H1 * W1 * C1), np.float32)
    for i in range(H1):
        for j in range(W1):
            col0 = (i * W1 + j) * C1
            for c in range(C0):
                for kh in range(K1):
                    for kw in range(K1):
                        row = c * Hin * Win + (i * S1 + kh) * Win + (j * S1 + kw)
                        W1_big[row, col0:col0 + C1] = w_c1[:, c, kh, kw]
    b1_big = np.tile(np.asarray(p["b_conv1"], np.float32), H1 * W1)[None, :]

    # conv2: (H1*W1*C1, H2*W2*C2) matrix on the NHWC-flat conv1 output.
    W2_big = np.zeros((H1 * W1 * C1, H2 * W2 * C2), np.float32)
    for oi in range(H2):
        for oj in range(W2):
            col0 = (oi * W2 + oj) * C2
            for dh in range(K2):
                for dw in range(K2):
                    r = (oi + dh) * W1 + (oj + dw)
                    W2_big[r * C1:(r + 1) * C1, col0:col0 + C2] = w_c2[:, :, dh, dw].T
    b2_big = np.tile(np.asarray(p["b_conv2"], np.float32), H2 * W2)[None, :]

    # fc1: permute rows from PyTorch's NCHW flatten order to NHWC-flat order.
    nchw = np.arange(C2 * H2 * W2).reshape(C2, H2, W2)
    perm = nchw.transpose(1, 2, 0).reshape(-1)          # perm[nhwc_idx] = nchw_idx
    w_fc1 = np.asarray(p["w_fc1"], np.float32)[perm, :]
    b_fc1 = np.asarray(p["b_fc1"], np.float32)[None, :]

    # fc2: explicit f32 cast, then zero-pad 3 -> N_PAD columns (lane-dense store).
    w_fc2 = np.asarray(p["w_fc2"], np.float32)          # (64, 3)
    b_fc2 = np.asarray(p["b_fc2"], np.float32)          # (3,)
    W4 = np.zeros((w_fc2.shape[0], N_PAD), np.float32); W4[:, :N_OUT] = w_fc2
    B4 = np.zeros((1, N_PAD), np.float32);               B4[0, :N_OUT] = b_fc2

    cd = compute_dtype
    return {
        "w1": jnp.asarray(W1_big, cd), "b1": jnp.asarray(b1_big, jnp.float32),
        "w2": jnp.asarray(W2_big, cd), "b2": jnp.asarray(b2_big, jnp.float32),
        "w3": jnp.asarray(w_fc1, cd),  "b3": jnp.asarray(b_fc1, jnp.float32),
        "w4": jnp.asarray(W4, cd),     "b4": jnp.asarray(B4, jnp.float32),
    }


# ------------------------------ parameter init ------------------------------

def kaiming_uniform(key, shape, fan_in):
    # matches torch.nn.init.kaiming_uniform_ default (a=0, leaky_relu gain=sqrt(2))
    bound = math.sqrt(2.0) * math.sqrt(3.0 / fan_in)
    return jax.random.uniform(key, shape, jnp.float32, -bound, bound)


def init_params(key):
    k1, k2, k3, k4 = jax.random.split(key, 4)
    return {
        # Conv2d(3, 16, kernel_size=3, stride=2)
        "w_conv1": kaiming_uniform(k1, (16, 3, 3, 3), fan_in=3 * 3 * 3),
        "b_conv1": jnp.zeros((16,), jnp.float32),
        # Conv2d(16, 16, kernel_size=2, stride=1)
        "w_conv2": kaiming_uniform(k2, (16, 16, 2, 2), fan_in=16 * 2 * 2),
        "b_conv2": jnp.zeros((16,), jnp.float32),
        # Linear(64, 64) stored as (in, out) for x @ W
        "w_fc1": kaiming_uniform(k3, (64, 64), fan_in=64),
        "b_fc1": jnp.zeros((64,), jnp.float32),
        # Linear(64, 3)
        "w_fc2": kaiming_uniform(k4, (64, 3), fan_in=64),
        "b_fc2": jnp.zeros((3,), jnp.float32),
    }


# --------------------------- references --------------------------------------

def ref_forward(x, p):
    """Full-precision (f32, HIGHEST) reference of the original PyTorch module."""
    prec = jax.lax.Precision.HIGHEST
    y = jax.lax.conv_general_dilated(x, p["w_conv1"], (2, 2), "VALID",
                                     dimension_numbers=("NCHW", "OIHW", "NCHW"),
                                     precision=prec)
    y = jax.nn.relu(y + p["b_conv1"][None, :, None, None])
    y = jax.lax.conv_general_dilated(y, p["w_conv2"], (1, 1), "VALID",
                                     dimension_numbers=("NCHW", "OIHW", "NCHW"),
                                     precision=prec)
    y = jax.nn.relu(y + p["b_conv2"][None, :, None, None])
    y = y.reshape(y.shape[0], -1)                       # PyTorch NCHW flatten
    y = jax.nn.relu(jnp.dot(y, p["w_fc1"], precision=prec) + p["b_fc1"])
    return jnp.dot(y, p["w_fc2"], precision=prec) + p["b_fc2"]


def ref_forward_matmul(x, pp):
    """Matched-precision (bf16 operands, f32 accum) plain-JAX reference."""
    h = x.reshape(x.shape[0], -1).astype(pp["w1"].dtype)
    h = jnp.maximum(jnp.dot(h, pp["w1"],
                            preferred_element_type=jnp.float32) + pp["b1"], 0.0)
    h = jnp.maximum(jnp.dot(h.astype(pp["w2"].dtype), pp["w2"],
                            preferred_element_type=jnp.float32) + pp["b2"], 0.0)
    h = jnp.maximum(jnp.dot(h.astype(pp["w3"].dtype), pp["w3"],
                            preferred_element_type=jnp.float32) + pp["b3"], 0.0)
    h = jnp.dot(h.astype(pp["w4"].dtype), pp["w4"],
                preferred_element_type=jnp.float32) + pp["b4"]
    return h[:, :N_OUT]


# ----------------------------------- main -----------------------------------

if __name__ == "__main__":
    key = jax.random.PRNGKey(0)
    kx, kp = jax.random.split(key)

    # _feature_size() assumes a 7x7 spatial input -> conv stack yields (16,2,2)=64 feats
    B = 2
    x = jax.random.normal(kx, (B, 3, 7, 7), jnp.float32)   # NCHW, like PyTorch
    params = init_params(kp)
    prepared = prepare_params(params)                       # one-time weight folding

    fwd = jax.jit(dqn_conv_forward)
    out = jax.block_until_ready(fwd(x, prepared))

    assert out.shape == (B, N_OUT), out.shape
    assert out.dtype == jnp.float32

    # Tight check vs a matched-precision (bf16-weight) JAX reference.
    ref_bf = ref_forward_matmul(x, prepared)
    assert jnp.allclose(out, ref_bf, atol=5e-3, rtol=5e-3), (out, ref_bf)

    # Loose check vs the full-f32 HIGHEST-precision reference (bf16 quantization).
    ref_hi = ref_forward(x, params)
    assert jnp.allclose(out, ref_hi, atol=1e-1, rtol=5e-2), (out, ref_hi)

    print("KERNEL_OK")
</pallas_src>

<mosaic_0001>
module attributes {stable_mosaic.version = 11 : i64} {
  func.func @_dqn_fused_kernel(%arg0: i32, %arg1: memref<2x147xbf16, #tpu.memory_space<vmem>>, %arg2: memref<147x144xbf16, #tpu.memory_space<vmem>>, %arg3: memref<1x144xf32, #tpu.memory_space<vmem>>, %arg4: memref<144x64xbf16, #tpu.memory_space<vmem>>, %arg5: memref<1x64xf32, #tpu.memory_space<vmem>>, %arg6: memref<64x64xbf16, #tpu.memory_space<vmem>>, %arg7: memref<1x64xf32, #tpu.memory_space<vmem>>, %arg8: memref<64x128xbf16, #tpu.memory_space<vmem>>, %arg9: memref<1x128xf32, #tpu.memory_space<vmem>>, %arg10: memref<2x128xf32, #tpu.memory_space<vmem>>) attributes {dimension_semantics = [#tpu.dimension_semantics<parallel>], iteration_bounds = array<i64: 1>, scalar_prefetch = 0 : i64, scratch_operands = 0 : i64, tpu.core_type = #tpu.core_type<tc>, window_params = [{transform_indices = @transform_0, window_bounds = array<i64: 2, 147>}, {pipeline_mode = #tpu.pipeline_mode<synchronous>, transform_indices = @transform_1, window_bounds = array<i64: 147, 144>}, {pipeline_mode = #tpu.pipeline_mode<synchronous>, transform_indices = @transform_2, window_bounds = array<i64: 1, 144>}, {pipeline_mode = #tpu.pipeline_mode<synchronous>, transform_indices = @transform_3, window_bounds = array<i64: 144, 64>}, {pipeline_mode = #tpu.pipeline_mode<synchronous>, transform_indices = @transform_4, window_bounds = array<i64: 1, 64>}, {pipeline_mode = #tpu.pipeline_mode<synchronous>, transform_indices = @transform_5, window_bounds = array<i64: 64, 64>}, {pipeline_mode = #tpu.pipeline_mode<synchronous>, transform_indices = @transform_6, window_bounds = array<i64: 1, 64>}, {pipeline_mode = #tpu.pipeline_mode<synchronous>, transform_indices = @transform_7, window_bounds = array<i64: 64, 128>}, {pipeline_mode = #tpu.pipeline_mode<synchronous>, transform_indices = @transform_8, window_bounds = array<i64: 1, 128>}, {transform_indices = @transform_9, window_bounds = array<i64: 2, 128>}]} {
    %c0 = arith.constant 0 : index
    %c0_0 = arith.constant 0 : index
    %0 = vector.load %arg1[%c0, %c0_0] : memref<2x147xbf16, #tpu.memory_space<vmem>>, vector<2x147xbf16>
    %c0_1 = arith.constant 0 : index
    %c0_2 = arith.constant 0 : index
    %1 = vector.load %arg2[%c0_1, %c0_2] : memref<147x144xbf16, #tpu.memory_space<vmem>>, vector<147x144xbf16>
    %cst = arith.constant dense<0.000000e+00> : vector<2x144xf32>
    %2 = tpu.matmul %0, %1, %cst {dimension_numbers = #tpu.dot_dimension_numbers<[1], [0], [0], [1], [0, 0, 1, 1], [], []>} : vector<2x147xbf16>, vector<147x144xbf16>, vector<2x144xf32> -> vector<2x144xf32>
    %c0_3 = arith.constant 0 : index
    %c0_4 = arith.constant 0 : index
    %3 = vector.load %arg3[%c0_3, %c0_4] : memref<1x144xf32, #tpu.memory_space<vmem>>, vector<1x144xf32>
    %4 = vector.broadcast %3 : vector<1x144xf32> to vector<2x144xf32>
    %5 = arith.addf %2, %4 : vector<2x144xf32>
    %cst_5 = arith.constant 0.000000e+00 : f32
    %6 = vector.broadcast %cst_5 : f32 to vector<2x144xf32>
    %7 = arith.maximumf %5, %6 : vector<2x144xf32>
    %8 = arith.truncf %7 : vector<2x144xf32> to vector<2x144xbf16>
    %c0_6 = arith.constant 0 : index
    %c0_7 = arith.constant 0 : index
    %9 = vector.load %arg4[%c0_6, %c0_7] : memref<144x64xbf16, #tpu.memory_space<vmem>>, vector<144x64xbf16>
    %cst_8 = arith.constant dense<0.000000e+00> : vector<2x64xf32>
    %10 = tpu.matmul %8, %9, %cst_8 {dimension_numbers = #tpu.dot_dimension_numbers<[1], [0], [0], [1], [0, 0, 1, 1], [], []>} : vector<2x144xbf16>, vector<144x64xbf16>, vector<2x64xf32> -> vector<2x64xf32>
    %c0_9 = arith.constant 0 : index
    %c0_10 = arith.constant 0 : index
    %11 = vector.load %arg5[%c0_9, %c0_10] : memref<1x64xf32, #tpu.memory_space<vmem>>, vector<1x64xf32>
    %12 = vector.broadcast %11 : vector<1x64xf32> to vector<2x64xf32>
    %13 = arith.addf %10, %12 : vector<2x64xf32>
    %cst_11 = arith.constant 0.000000e+00 : f32
    %14 = vector.broadcast %cst_11 : f32 to vector<2x64xf32>
    %15 = arith.maximumf %13, %14 : vector<2x64xf32>
    %16 = arith.truncf %15 : vector<2x64xf32> to vector<2x64xbf16>
    %c0_12 = arith.constant 0 : index
    %c0_13 = arith.constant 0 : index
    %17 = vector.load %arg6[%c0_12, %c0_13] : memref<64x64xbf16, #tpu.memory_space<vmem>>, vector<64x64xbf16>
    %cst_14 = arith.constant dense<0.000000e+00> : vector<2x64xf32>
    %18 = tpu.matmul %16, %17, %cst_14 {dimension_numbers = #tpu.dot_dimension_numbers<[1], [0], [0], [1], [0, 0, 1, 1], [], []>} : vector<2x64xbf16>, vector<64x64xbf16>, vector<2x64xf32> -> vector<2x64xf32>
    %c0_15 = arith.constant 0 : index
    %c0_16 = arith.constant 0 : index
    %19 = vector.load %arg7[%c0_15, %c0_16] : memref<1x64xf32, #tpu.memory_space<vmem>>, vector<1x64xf32>
    %20 = vector.broadcast %19 : vector<1x64xf32> to vector<2x64xf32>
    %21 = arith.addf %18, %20 : vector<2x64xf32>
    %cst_17 = arith.constant 0.000000e+00 : f32
    %22 = vector.broadcast %cst_17 : f32 to vector<2x64xf32>
    %23 = arith.maximumf %21, %22 : vector<2x64xf32>
    %24 = arith.truncf %23 : vector<2x64xf32> to vector<2x64xbf16>
    %c0_18 = arith.constant 0 : index
    %c0_19 = arith.constant 0 : index
    %25 = vector.load %arg8[%c0_18, %c0_19] : memref<64x128xbf16, #tpu.memory_space<vmem>>, vector<64x128xbf16>
    %cst_20 = arith.constant dense<0.000000e+00> : vector<2x128xf32>
    %26 = tpu.matmul %24, %25, %cst_20 {dimension_numbers = #tpu.dot_dimension_numbers<[1], [0], [0], [1], [0, 0, 1, 1], [], []>} : vector<2x64xbf16>, vector<64x128xbf16>, vector<2x128xf32> -> vector<2x128xf32>
    %c0_21 = arith.constant 0 : index
    %c0_22 = arith.constant 0 : index
    %27 = vector.load %arg9[%c0_21, %c0_22] : memref<1x128xf32, #tpu.memory_space<vmem>>, vector<1x128xf32>
    %28 = vector.broadcast %27 : vector<1x128xf32> to vector<2x128xf32>
    %29 = arith.addf %26, %28 : vector<2x128xf32>
    %c0_23 = arith.constant 0 : index
    %c0_24 = arith.constant 0 : index
    %30 = vector.load %arg10[%c0_23, %c0_24] : memref<2x128xf32, #tpu.memory_space<vmem>>, vector<2x128xf32>
    tpu.vector_store %arg10[%c0_23, %c0_24], %29 {strides = array<i32>} : memref<2x128xf32, #tpu.memory_space<vmem>>, vector<2x128xf32>,
    return
  }
  func.func @transform_0(%arg0: i32) -> (i32, i32) {
    %c0_i32 = arith.constant 0 : i32
    %c0_i32_0 = arith.constant 0 : i32
    return %arg0, %c0_i32 : i32, i32
  }
  func.func @transform_1(%arg0: i32) -> (i32, i32) {
    %c0_i32 = arith.constant 0 : i32
    %c0_i32_0 = arith.constant 0 : i32
    %c0_i32_1 = arith.constant 0 : i32
    return %c0_i32, %c0_i32_0 : i32, i32
  }
  func.func @transform_2(%arg0: i32) -> (i32, i32) {
    %c0_i32 = arith.constant 0 : i32
    %c0_i32_0 = arith.constant 0 : i32
    %c0_i32_1 = arith.constant 0 : i32
    return %c0_i32, %c0_i32_0 : i32, i32
  }
  func.func @transform_3(%arg0: i32) -> (i32, i32) {
    %c0_i32 = arith.constant 0 : i32
    %c0_i32_0 = arith.constant 0 : i32
    %c0_i32_1 = arith.constant 0 : i32
    return %c0_i32, %c0_i32_0 : i32, i32
  }
  func.func @transform_4(%arg0: i32) -> (i32, i32) {
    %c0_i32 = arith.constant 0 : i32
    %c0_i32_0 = arith.constant 0 : i32
    %c0_i32_1 = arith.constant 0 : i32
    return %c0_i32, %c0_i32_0 : i32, i32
  }
  func.func @transform_5(%arg0: i32) -> (i32, i32) {
    %c0_i32 = arith.constant 0 : i32
    %c0_i32_0 = arith.constant 0 : i32
    %c0_i32_1 = arith.constant 0 : i32
    return %c0_i32, %c0_i32_0 : i32, i32
  }
  func.func @transform_6(%arg0: i32) -> (i32, i32) {
    %c0_i32 = arith.constant 0 : i32
    %c0_i32_0 = arith.constant 0 : i32
    %c0_i32_1 = arith.constant 0 : i32
    return %c0_i32, %c0_i32_0 : i32, i32
  }
  func.func @transform_7(%arg0: i32) -> (i32, i32) {
    %c0_i32 = arith.constant 0 : i32
    %c0_i32_0 = arith.constant 0 : i32
    %c0_i32_1 = arith.constant 0 : i32
    return %c0_i32, %c0_i32_0 : i32, i32
  }
  func.func @transform_8(%arg0: i32) -> (i32, i32) {
    %c0_i32 = arith.constant 0 : i32
    %c0_i32_0 = arith.constant 0 : i32
    %c0_i32_1 = arith.constant 0 : i32
    return %c0_i32, %c0_i32_0 : i32, i32
  }
  func.func @transform_9(%arg0: i32) -> (i32, i32) {
    %c0_i32 = arith.constant 0 : i32
    %c0_i32_0 = arith.constant 0 : i32
    return %arg0, %c0_i32 : i32, i32
  }
}

</mosaic_0001>

<llo_original>
// kernel: dqn_conv_forward.1
$region0: #{dqn_conv_forward.1}
  #allocation0 [shape = 'u32[]', space=smem, size = 0x4, offset = 0x4, fixed_abs, tag = 'smem constant byte address 0x4 - core index']
  #allocation1 [shape = 'u32[144,128]{1,0:T(1,128)}', space=vmem, size = 0x12000, scoped, tag = 'internal scratch']
  %s0 = inlined_call_operand.vmem [shape: bf16[2,147], index: 0, kind: input, shape index: {}]
  %s1 = inlined_call_operand.vmem [shape: bf16[147,144], index: 1, kind: input, shape index: {}]
  %s2 = inlined_call_operand.vmem [shape: f32[1,144], index: 2, kind: input, shape index: {}]
  %s3 = inlined_call_operand.vmem [shape: bf16[144,64], index: 3, kind: input, shape index: {}]
  %s4 = inlined_call_operand.vmem [shape: f32[1,64], index: 4, kind: input, shape index: {}]
  %s5 = inlined_call_operand.vmem [shape: bf16[64,64], index: 5, kind: input, shape index: {}]
  %s6 = inlined_call_operand.vmem [shape: f32[1,64], index: 6, kind: input, shape index: {}]
  %s7 = inlined_call_operand.vmem [shape: bf16[64,128], index: 7, kind: input, shape index: {}]
  %s8 = inlined_call_operand.vmem [shape: f32[1,128], index: 8, kind: input, shape index: {}]
  %s9 = inlined_call_operand.hbm [shape: f32[2,128], index: 9, kind: output, shape index: {}]
  %s10 = sld [smem:[#allocation0]]
  $region46: #{dqn_conv_forward.1} parent=0
    _
  %s12 = ssub.s32 1, %s10
  %s13 = scalar_select 0, %s12, %s10
  $region1: #{dqn_conv_forward.1} parent=0
    #allocation2 [shape = 'u8[1024]{0}', space=vmem, size = 0x400, scoped, tag = 'output window, operand 0, single buffered']
    #allocation3 [shape = 's32[1]{0}', space=sflag, size = 0x4, scoped, tag = 'scoped memory for dqn_conv_forward.1']
    %14 = vsyncpa [#allocation3], 0
    // Predicated region
    $region2: #{dqn_conv_forward.1} parent=1 // pred_check
      _
    $region3: #{dqn_conv_forward.1} parent=1 // pred_check_branch
      %16 = sbr.rel (0) target = $region5
    $region4: #{dqn_conv_forward.1} parent=1 // pred_region
      _
    $region5: #{dqn_conv_forward.1} parent=1 // pred_fallthru
      _
    // Predicated region
    $region6: #{dqn_conv_forward.1} parent=1 // pred_check
      _
    $region7: #{dqn_conv_forward.1} parent=1 // pred_check_branch
      %18 = sbr.rel (0) target = $region9
    $region8: #{dqn_conv_forward.1} parent=1 // pred_region
      _
    $region9: #{dqn_conv_forward.1} parent=1 // pred_fallthru
      _
    // Predicated region
    $region10: #{dqn_conv_forward.1} parent=1 // pred_check
      _
    $region11: #{dqn_conv_forward.1} parent=1 // pred_check_branch
      %20 = sbr.rel (0) target = $region13
    $region12: #{dqn_conv_forward.1} parent=1 // pred_region
      _
    $region13: #{dqn_conv_forward.1} parent=1 // pred_fallthru
      _
    // Predicated region
    $region14: #{dqn_conv_forward.1} parent=1 // pred_check
      _
    $region15: #{dqn_conv_forward.1} parent=1 // pred_check_branch
      %22 = sbr.rel (0) target = $region17
    $region16: #{dqn_conv_forward.1} parent=1 // pred_region
      _
    $region17: #{dqn_conv_forward.1} parent=1 // pred_fallthru
      _
    // Predicated region
    $region18: #{dqn_conv_forward.1} parent=1 // pred_check
      _
    $region19: #{dqn_conv_forward.1} parent=1 // pred_check_branch
      %24 = sbr.rel (0) target = $region21
    $region20: #{dqn_conv_forward.1} parent=1 // pred_region
      _
    $region21: #{dqn_conv_forward.1} parent=1 // pred_fallthru
      _
    // Predicated region
    $region22: #{dqn_conv_forward.1} parent=1 // pred_check
      _
    $region23: #{dqn_conv_forward.1} parent=1 // pred_check_branch
      %26 = sbr.rel (0) target = $region25
    $region24: #{dqn_conv_forward.1} parent=1 // pred_region
      _
    $region25: #{dqn_conv_forward.1} parent=1 // pred_fallthru
      _
    // Predicated region
    $region26: #{dqn_conv_forward.1} parent=1 // pred_check
      _
    $region27: #{dqn_conv_forward.1} parent=1 // pred_check_branch
      %28 = sbr.rel (0) target = $region29
    $region28: #{dqn_conv_forward.1} parent=1 // pred_region
      _
    $region29: #{dqn_conv_forward.1} parent=1 // pred_fallthru
      _
    // Predicated region
    $region30: #{dqn_conv_forward.1} parent=1 // pred_check
      _
    $region31: #{dqn_conv_forward.1} parent=1 // pred_check_branch
      %30 = sbr.rel (0) target = $region33
    $region32: #{dqn_conv_forward.1} parent=1 // pred_region
      _
    $region33: #{dqn_conv_forward.1} parent=1 // pred_fallthru
      _
    // Predicated region
    $region34: #{dqn_conv_forward.1} parent=1 // pred_check
      _
    $region35: #{dqn_conv_forward.1} parent=1 // pred_check_branch
      %32 = sbr.rel (0) target = $region37
    $region36: #{dqn_conv_forward.1} parent=1 // pred_region
      _
    $region37: #{dqn_conv_forward.1} parent=1 // pred_fallthru
      _
    %v34 = vld [vmem:[%s0] sm:$0x3]
    %v35 = vld [vmem:[%s1] sm:$0xff]
    %v36 = vld [vmem:[%s1 + $0x8] sm:$0xff]
    %v37 = vld [vmem:[%s1 + $0x10] sm:$0xff]
    %v38 = vld [vmem:[%s1 + $0x18] sm:$0xff]
    %v39 = vld [vmem:[%s1 + $0x20] sm:$0xff]
    %v40 = vld [vmem:[%s1 + $0x28] sm:$0xff]
    %v41 = vld [vmem:[%s1 + $0x30] sm:$0xff]
    %v42 = vld [vmem:[%s1 + $0x38] sm:$0xff]
    %v43 = vld [vmem:[%s1 + $0x40] sm:$0xff]
    %v44 = vld [vmem:[%s1 + $0x48] sm:$0xff]
    %v45 = vld [vmem:[%s1 + $0x50] sm:$0xff]
    %v46 = vld [vmem:[%s1 + $0x58] sm:$0xff]
    %v47 = vld [vmem:[%s1 + $0x60] sm:$0xff]
    %v48 = vld [vmem:[%s1 + $0x68] sm:$0xff]
    %v49 = vld [vmem:[%s1 + $0x70] sm:$0xff]
    %v50 = vld [vmem:[%s1 + $0x78] sm:$0xff]
    %v51 = vld [vmem:[%s1 + $0x80] sm:$0xff]
    %v52 = vld [vmem:[%s1 + $0x88] sm:$0xff]
    %v53 = vld [vmem:[%s1 + $0x90] sm:$0x33]
    %v54 = vld [vmem:[%s2] sm:$0x3]
    %v56 = vlaneseq
    %v57 = vshrl.u32 %v56, 7
    %v58 = vsub.s32 0, %v57
    %v59 = vrot.slane %v54, %v58
    %v60 = vlaneseq
    %v61 = vshrl.u32 %v60, 7
    %v62 = vsub.s32 1, %v61
    %v63 = vrot.slane %v54, %v62
    %v68 = vunpack.c.l.s4 1966171168
    %v69 = vunpack.c.0.s8 %v68
    %v70 = vlaneseq
    %v71 = vshrl.u32 %v70, 7
    %v72 = vsub.s32 %v69, %v71
    %v73 = vrot.slane %v34, %v72
    %v74 = vcombine.high %v73, %v73
    %v76 = vunpack.c.l.s4 1966171168
    %v77 = vunpack.c.0.s8 %v76
    %v78 = vlaneseq
    %v79 = vshrl.u32 %v78, 7
    %v80 = vsub.s32 %v77, %v79
    %v81 = vrot.slane %v73, %v80
    %v83 = vunpack.c.l.s4 1966171168
    %v84 = vunpack.c.0.s8 %v83
    %v85 = vlaneseq
    %v86 = vshrl.u32 %v85, 7
    %v87 = vsub.s32 %v84, %v86
    %v88 = vrot.slane %v74, %v87
    %v109 = vunpack.c.l.b16 %v35
    %v110 = vunpack.c.h.b16 %v35
    %v111 = vunpack.c.l.b16 %v36
    %v112 = vunpack.c.h.b16 %v36
    %v113 = vunpack.c.l.b16 %v37
    %v114 = vunpack.c.h.b16 %v37
    %v115 = vunpack.c.l.b16 %v38
    %v116 = vunpack.c.h.b16 %v38
    %v117 = vunpack.c.l.b16 %v39
    %v118 = vunpack.c.h.b16 %v39
    %v119 = vunpack.c.l.b16 %v40
    %v120 = vunpack.c.h.b16 %v40
    %v121 = vunpack.c.l.b16 %v41
    %v122 = vunpack.c.h.b16 %v41
    %v123 = vunpack.c.l.b16 %v42
    %v124 = vunpack.c.h.b16 %v42
    %v125 = vunpack.c.l.b16 %v43
    %v126 = vunpack.c.h.b16 %v43
    %v127 = vunpack.c.l.b16 %v44
    %v128 = vunpack.c.h.b16 %v44
    %v129 = vunpack.c.l.b16 %v45
    %v130 = vunpack.c.h.b16 %v45
    %v131 = vunpack.c.l.b16 %v46
    %v132 = vunpack.c.h.b16 %v46
    %v133 = vunpack.c.l.b16 %v47
    %v134 = vunpack.c.h.b16 %v47
    %v135 = vunpack.c.l.b16 %v48
    %v136 = vunpack.c.h.b16 %v48
    %v137 = vunpack.c.l.b16 %v49
    %v138 = vunpack.c.h.b16 %v49
    %v139 = vunpack.c.l.b16 %v50
    %v140 = vunpack.c.h.b16 %v50
    %v141 = vunpack.c.l.b16 %v51
    %v142 = vunpack.c.h.b16 %v51
    %v143 = vunpack.c.l.b16 %v52
    %v144 = vunpack.c.h.b16 %v52
    %v145 = vunpack.c.l.b16 %v53
    %v146 = vunpack.c.h.b16 %v53
    %v147 = vpack.c.b16 %v111, %v109
    %v148 = vpack.c.b16 %v112, %v110
    %v149 = vpack.c.b16 %v115, %v113
    %v150 = vpack.c.b16 %v116, %v114
    %v151 = vpack.c.b16 %v119, %v117
    %v152 = vpack.c.b16 %v120, %v118
    %v153 = vpack.c.b16 %v123, %v121
    %v154 = vpack.c.b16 %v124, %v122
    %v155 = vpack.c.b16 %v127, %v125
    %v156 = vpack.c.b16 %v128, %v126
    %v157 = vpack.c.b16 %v131, %v129
    %v158 = vpack.c.b16 %v132, %v130
    %v159 = vpack.c.b16 %v135, %v133
    %v160 = vpack.c.b16 %v136, %v134
    %v161 = vpack.c.b16 %v139, %v137
    %v162 = vpack.c.b16 %v140, %v138
    %v163 = vpack.c.b16 %v143, %v141
    %v164 = vpack.c.b16 %v144, %v142
    %v165 = vpack.c.b16 %v145, %v145
    %v166 = vpack.c.b16 %v146, %v146
    %vm185 = vcmask 154624
    %v187 = vsel %vm185, %v88, 0
    %vm189 = vcmask 1040384
    %vm190 = vcmask 1041408
    %v191 = vsel %vm189, 4294967295, 65535
    %v192 = vsel %vm190, %v191, 0
    %v194 = vand.u32 %v165, %v192
    %v197 = vand.u32 %v166, %v192
    %199 = vmatprep.subr.bf16.mxu0 %v148
    %200 = vmatpush1.bf16.msra.mxu0 %v147
    %201 = vmatprep.subr.bf16.mxu0 %v150
    %202 = vmatpush1.bf16.msra.mxu0 %v149
    %203 = vmatprep.subr.bf16.mxu0 %v152
    %204 = vmatpush1.bf16.msra.mxu0 %v151
    %205 = vmatprep.subr.bf16.mxu0 %v154
    %206 = vmatpush1.bf16.msra.mxu0 %v153
    %207 = vmatprep.subr.bf16.mxu0 %v156
    %208 = vmatpush1.bf16.msra.mxu0 %v155
    %209 = vmatprep.subr.bf16.mxu0 %v158
    %210 = vmatpush1.bf16.msra.mxu0 %v157
    %211 = vmatprep.subr.bf16.mxu0 %v160
    %212 = vmatpush1.bf16.msra.mxu0 %v159
    %213 = vmatprep.subr.bf16.mxu0 %v162
    %214 = vmatpush1.bf16.msra.mxu0 %v161
    %215 = vmatprep.subr.bf16.mxu0 %v164
    %216 = vmatpush1.bf16.msra.mxu0 %v163
    %217 = vmatprep.subr.bf16.mxu0 %v197
    %218 = vmatpush1.bf16.msra.mxu0 %v194
    %219 = vmatprep.subr.bf16.mxu0 0
    %220 = vmatpush1.bf16.msra.mxu0 0
    %221 = vmatprep.subr.bf16.mxu0 0
    %222 = vmatpush1.bf16.msra.mxu0 0
    %223 = vmatprep.subr.bf16.mxu0 0
    %224 = vmatpush1.bf16.msra.mxu0 0
    %225 = vmatprep.subr.bf16.mxu0 0
    %226 = vmatpush1.bf16.msra.mxu0 0
    %227 = vmatprep.subr.bf16.mxu0 0
    %228 = vmatpush1.bf16.msra.mxu0 0
    %229 = vmatprep.subr.bf16.mxu0 0
    %230 = vmatpush1.bf16.msra.mxu0 0
    %231 = vmatprep.mubr.bf16.mxu0 %v187
    %232 = vmatmul.mubr.bf16.gmra.mrb[0].mxu0 %v81
    %v233 = vpop.f32.mrb[0].mxu0
    %v234 = vadd.f32 %v59, %v233
    %v235 = vpop.f32.mrb[0].mxu0
    %v236 = vadd.f32 %v63, %v235
    %v237 = vpop.f32.mrb[0].mxu0
    %v238 = vpop.f32.mrb[0].mxu0
    %239 = vdwg.mxu0
    %v240 = vmax.f32 %v234, 0.0
    %v241 = vmax.f32 %v236, 0.0
    %v242 = vpack.c.bf16 %v240, %v240
    %v243 = vpack.c.bf16 %v241, %v241
    %v244 = vld [vmem:[%s3] sm:$0xf]
    %v245 = vld [vmem:[%s3 + $0x4] sm:$0xf]
    %v246 = vld [vmem:[%s3 + $0x8] sm:$0xf]
    %v247 = vld [vmem:[%s3 + $0xc] sm:$0xf]
    %v248 = vld [vmem:[%s3 + $0x10] sm:$0xf]
    %v249 = vld [vmem:[%s3 + $0x14] sm:$0xf]
    %v250 = vld [vmem:[%s3 + $0x18] sm:$0xf]
    %v251 = vld [vmem:[%s3 + $0x1c] sm:$0xf]
    %v252 = vld [vmem:[%s3 + $0x20] sm:$0xf]
    %v253 = vld [vmem:[%s3 + $0x24] sm:$0xf]
    %v254 = vld [vmem:[%s3 + $0x28] sm:$0xf]
    %v255 = vld [vmem:[%s3 + $0x2c] sm:$0xf]
    %v256 = vld [vmem:[%s3 + $0x30] sm:$0xf]
    %v257 = vld [vmem:[%s3 + $0x34] sm:$0xf]
    %v258 = vld [vmem:[%s3 + $0x38] sm:$0xf]
    %v259 = vld [vmem:[%s3 + $0x3c] sm:$0xf]
    %v260 = vld [vmem:[%s3 + $0x40] sm:$0xf]
    %v261 = vld [vmem:[%s3 + $0x44] sm:$0xf]
    %v262 = vld [vmem:[%s4] sm:$0x1]
    %v264 = vlaneseq
    %v265 = vshrl.u32 %v264, 7
    %v266 = vsub.s32 0, %v265
    %v267 = vrot.slane %v262, %v266
    %v287 = vunpack.c.l.b16 %v244
    %v288 = vunpack.c.l.b16 %v245
    %v289 = vunpack.c.l.b16 %v246
    %v290 = vunpack.c.l.b16 %v247
    %v291 = vunpack.c.l.b16 %v248
    %v292 = vunpack.c.l.b16 %v249
    %v293 = vunpack.c.l.b16 %v250
    %v294 = vunpack.c.l.b16 %v251
    %v295 = vunpack.c.l.b16 %v252
    %v296 = vunpack.c.l.b16 %v253
    %v297 = vunpack.c.l.b16 %v254
    %v298 = vunpack.c.l.b16 %v255
    %v299 = vunpack.c.l.b16 %v256
    %v300 = vunpack.c.l.b16 %v257
    %v301 = vunpack.c.l.b16 %v258
    %v302 = vunpack.c.l.b16 %v259
    %v303 = vunpack.c.l.b16 %v260
    %v304 = vunpack.c.l.b16 %v261
    %v305 = vpack.c.b16 %v288, %v287
    %v306 = vpack.c.b16 %v290, %v289
    %v307 = vpack.c.b16 %v292, %v291
    %v308 = vpack.c.b16 %v294, %v293
    %v309 = vpack.c.b16 %v296, %v295
    %v310 = vpack.c.b16 %v298, %v297
    %v311 = vpack.c.b16 %v300, %v299
    %v312 = vpack.c.b16 %v302, %v301
    %v313 = vpack.c.b16 %v304, %v303
    %vm323 = vcmask 130048
    %v325 = vsel %vm323, %v243, 0
    %327 = vmatprep.subr.bf16.mxu0 0
    %328 = vmatpush1.bf16.msra.mxu0 %v305
    %329 = vmatprep.subr.bf16.mxu0 0
    %330 = vmatpush1.bf16.msra.mxu0 %v306
    %331 = vmatprep.subr.bf16.mxu0 0
    %332 = vmatpush1.bf16.msra.mxu0 %v307
    %333 = vmatprep.subr.bf16.mxu0 0
    %334 = vmatpush1.bf16.msra.mxu0 %v308
    %335 = vmatprep.subr.bf16.mxu0 0
    %336 = vmatpush1.bf16.msra.mxu0 %v309
    %337 = vmatprep.subr.bf16.mxu0 0
    %338 = vmatpush1.bf16.msra.mxu0 %v310
    %339 = vmatprep.subr.bf16.mxu0 0
    %340 = vmatpush1.bf16.msra.mxu0 %v311
    %341 = vmatprep.subr.bf16.mxu0 0
    %342 = vmatpush1.bf16.msra.mxu0 %v312
    %343 = vmatprep.subr.bf16.mxu0 0
    %344 = vmatpush1.bf16.msra.mxu0 %v313
    %345 = vmatprep.subr.bf16.mxu0 0
    %346 = vmatpush1.bf16.msra.mxu0 0
    %347 = vmatprep.subr.bf16.mxu0 0
    %348 = vmatpush1.bf16.msra.mxu0 0
    %349 = vmatprep.subr.bf16.mxu0 0
    %350 = vmatpush1.bf16.msra.mxu0 0
    %351 = vmatprep.subr.bf16.mxu0 0
    %352 = vmatpush1.bf16.msra.mxu0 0
    %353 = vmatprep.subr.bf16.mxu0 0
    %354 = vmatpush1.bf16.msra.mxu0 0
    %355 = vmatprep.subr.bf16.mxu0 0
    %356 = vmatpush1.bf16.msra.mxu0 0
    %357 = vmatprep.subr.bf16.mxu0 0
    %358 = vmatpush1.bf16.msra.mxu0 0
    %359 = vmatprep.mubr.bf16.mxu0 %v325
    %360 = vmatmul.mubr.bf16.gmra.mrb[0].mxu0 %v242
    %v361 = vpop.f32.mrb[0].mxu0
    %v362 = vadd.f32 %v267, %v361
    %v363 = vpop.f32.mrb[0].mxu0
    %v364 = vpop.f32.mrb[0].mxu0
    %v365 = vpop.f32.mrb[0].mxu0
    %366 = vdwg.mxu0
    %v367 = vmax.f32 %v362, 0.0
    %v368 = vpack.c.bf16 %v367, %v367
    %v369 = vld [vmem:[%s5] sm:$0xf]
    %v370 = vld [vmem:[%s5 + $0x4] sm:$0xf]
    %v371 = vld [vmem:[%s5 + $0x8] sm:$0xf]
    %v372 = vld [vmem:[%s5 + $0xc] sm:$0xf]
    %v373 = vld [vmem:[%s5 + $0x10] sm:$0xf]
    %v374 = vld [vmem:[%s5 + $0x14] sm:$0xf]
    %v375 = vld [vmem:[%s5 + $0x18] sm:$0xf]
    %v376 = vld [vmem:[%s5 + $0x1c] sm:$0xf]
    %v377 = vld [vmem:[%s6] sm:$0x1]
    %v379 = vlaneseq
    %v380 = vshrl.u32 %v379, 7
    %v381 = vsub.s32 0, %v380
    %v382 = vrot.slane %v377, %v381
    %v392 = vunpack.c.l.b16 %v369
    %v393 = vunpack.c.l.b16 %v370
    %v394 = vunpack.c.l.b16 %v371
    %v395 = vunpack.c.l.b16 %v372
    %v396 = vunpack.c.l.b16 %v373
    %v397 = vunpack.c.l.b16 %v374
    %v398 = vunpack.c.l.b16 %v375
    %v399 = vunpack.c.l.b16 %v376
    %v400 = vpack.c.b16 %v393, %v392
    %v401 = vpack.c.b16 %v395, %v394
    %v402 = vpack.c.b16 %v397, %v396
    %v403 = vpack.c.b16 %v399, %v398
    %vm408 = vcmask 523264
    %v410 = vsel %vm408, %v368, 0
    %412 = vmatprep.subr.bf16.mxu0 0
    %413 = vmatpush1.bf16.msra.mxu0 %v400
    %414 = vmatprep.subr.bf16.mxu0 0
    %415 = vmatpush1.bf16.msra.mxu0 %v401
    %416 = vmatprep.subr.bf16.mxu0 0
    %417 = vmatpush1.bf16.msra.mxu0 %v402
    %418 = vmatprep.subr.bf16.mxu0 0
    %419 = vmatpush1.bf16.msra.mxu0 %v403
    %420 = vmatprep.subr.bf16.mxu0 0
    %421 = vmatpush1.bf16.msra.mxu0 0
    %422 = vmatprep.subr.bf16.mxu0 0
    %423 = vmatpush1.bf16.msra.mxu0 0
    %424 = vmatprep.subr.bf16.mxu0 0
    %425 = vmatpush1.bf16.msra.mxu0 0
    %426 = vmatprep.subr.bf16.mxu0 0
    %427 = vmatpush1.bf16.msra.mxu0 0
    %428 = vmatprep.subr.bf16.mxu0 0
    %429 = vmatpush1.bf16.msra.mxu0 0
    %430 = vmatprep.subr.bf16.mxu0 0
    %431 = vmatpush1.bf16.msra.mxu0 0
    %432 = vmatprep.subr.bf16.mxu0 0
    %433 = vmatpush1.bf16.msra.mxu0 0
    %434 = vmatprep.subr.bf16.mxu0 0
    %435 = vmatpush1.bf16.msra.mxu0 0
    %436 = vmatprep.subr.bf16.mxu0 0
    %437 = vmatpush1.bf16.msra.mxu0 0
    %438 = vmatprep.subr.bf16.mxu0 0
    %439 = vmatpush1.bf16.msra.mxu0 0
    %440 = vmatprep.subr.bf16.mxu0 0
    %441 = vmatpush1.bf16.msra.mxu0 0
    %442 = vmatprep.subr.bf16.mxu0 0
    %443 = vmatpush1.bf16.msra.mxu0 0
    %444 = vmatprep.mubr.bf16.mxu0 0
    %445 = vmatmul.mubr.bf16.gmra.mrb[0].mxu0 %v410
    %v446 = vpop.f32.mrb[0].mxu0
    %v447 = vadd.f32 %v382, %v446
    %v448 = vpop.f32.mrb[0].mxu0
    %v449 = vpop.f32.mrb[0].mxu0
    %v450 = vpop.f32.mrb[0].mxu0
    %451 = vdwg.mxu0
    %v452 = vmax.f32 %v447, 0.0
    %v453 = vpack.c.bf16 %v452, %v452
    %v454 = vld [vmem:[%s7] sm:$0xf]
    %v455 = vld [vmem:[%s7 + $0x4] sm:$0xf]
    %v456 = vld [vmem:[%s7 + $0x8] sm:$0xf]
    %v457 = vld [vmem:[%s7 + $0xc] sm:$0xf]
    %v458 = vld [vmem:[%s7 + $0x10] sm:$0xf]
    %v459 = vld [vmem:[%s7 + $0x14] sm:$0xf]
    %v460 = vld [vmem:[%s7 + $0x18] sm:$0xf]
    %v461 = vld [vmem:[%s7 + $0x1c] sm:$0xf]
    %v462 = vld [vmem:[%s8] sm:$0x1]
    %v464 = vlaneseq
    %v465 = vshrl.u32 %v464, 7
    %v466 = vsub.s32 0, %v465
    %v467 = vrot.slane %v462, %v466
    %v477 = vunpack.c.l.b16 %v454
    %v478 = vunpack.c.l.b16 %v455
    %v479 = vunpack.c.l.b16 %v456
    %v480 = vunpack.c.l.b16 %v457
    %v481 = vunpack.c.l.b16 %v458
    %v482 = vunpack.c.l.b16 %v459
    %v483 = vunpack.c.l.b16 %v460
    %v484 = vunpack.c.l.b16 %v461
    %v485 = vpack.c.b16 %v478, %v477
    %v486 = vpack.c.b16 %v480, %v479
    %v487 = vpack.c.b16 %v482, %v481
    %v488 = vpack.c.b16 %v484, %v483
    %v494 = vsel %vm408, %v453, 0
    %496 = vmatprep.subr.bf16.mxu0 0
    %497 = vmatpush1.bf16.msra.mxu0 %v485
    %498 = vmatprep.subr.bf16.mxu0 0
    %499 = vmatpush1.bf16.msra.mxu0 %v486
    %500 = vmatprep.subr.bf16.mxu0 0
    %501 = vmatpush1.bf16.msra.mxu0 %v487
    %502 = vmatprep.subr.bf16.mxu0 0
    %503 = vmatpush1.bf16.msra.mxu0 %v488
    %504 = vmatprep.subr.bf16.mxu0 0
    %505 = vmatpush1.bf16.msra.mxu0 0
    %506 = vmatprep.subr.bf16.mxu0 0
    %507 = vmatpush1.bf16.msra.mxu0 0
    %508 = vmatprep.subr.bf16.mxu0 0
    %509 = vmatpush1.bf16.msra.mxu0 0
    %510 = vmatprep.subr.bf16.mxu0 0
    %511 = vmatpush1.bf16.msra.mxu0 0
    %512 = vmatprep.subr.bf16.mxu0 0
    %513 = vmatpush1.bf16.msra.mxu0 0
    %514 = vmatprep.subr.bf16.mxu0 0
    %515 = vmatpush1.bf16.msra.mxu0 0
    %516 = vmatprep.subr.bf16.mxu0 0
    %517 = vmatpush1.bf16.msra.mxu0 0
    %518 = vmatprep.subr.bf16.mxu0 0
    %519 = vmatpush1.bf16.msra.mxu0 0
    %520 = vmatprep.subr.bf16.mxu0 0
    %521 = vmatpush1.bf16.msra.mxu0 0
    %522 = vmatprep.subr.bf16.mxu0 0
    %523 = vmatpush1.bf16.msra.mxu0 0
    %524 = vmatprep.subr.bf16.mxu0 0
    %525 = vmatpush1.bf16.msra.mxu0 0
    %526 = vmatprep.subr.bf16.mxu0 0
    %527 = vmatpush1.bf16.msra.mxu0 0
    %528 = vmatprep.mubr.bf16.mxu0 0
    %529 = vmatmul.mubr.bf16.gmra.mrb[0].mxu0 %v494
    %v530 = vpop.f32.mrb[0].mxu0
    %v531 = vadd.f32 %v467, %v530
    %v532 = vpop.f32.mrb[0].mxu0
    %v533 = vpop.f32.mrb[0].mxu0
    %v534 = vpop.f32.mrb[0].mxu0
    %535 = vdwg.mxu0
    %536 = vst [vmem:[#allocation2] sm:$0x3] %v531
    // Predicated region
    $region38: #{dqn_conv_forward.1} parent=1 // pred_check
      _
    $region39: #{dqn_conv_forward.1} parent=1 // pred_check_branch
      %538 = sbr.rel (0) target = $region41
    $region40: #{dqn_conv_forward.1} parent=1 // pred_region
      %s540 = ssub.s32 32, 32
      %541 = vsyncadd [#allocation3], %s540
      %s543 = sshll.u32 [#allocation2], 4
      %s544 = int_to_ptr.vmem [resolvable:$true] %s543
      %546 = dma.vmem_to_hbm [thread:$0]  %s544, 32, %s9, [#allocation3]
    $region41: #{dqn_conv_forward.1} parent=1 // pred_fallthru
      _
    // Predicated region
    $region42: #{dqn_conv_forward.1} parent=1 // pred_check
      _
    $region43: #{dqn_conv_forward.1} parent=1 // pred_check_branch
      %548 = sbr.rel (0) target = $region45
    $region44: #{dqn_conv_forward.1} parent=1 // pred_region
      %549 = dma.done [#allocation3], 32
    $region45: #{dqn_conv_forward.1} parent=1 // pred_fallthru
      _
    %550 = vsyncpa [#allocation3], 1

</llo_original>
